<compile_context>
chip_gen: v5e
topology: v5e:2x2
jax: 0.10.0
libtpu: 0.0.40
codegen_flags: <defaults>
</compile_context>

<pallas_src>
import jax
import jax.numpy as jnp
from jax.experimental import pallas as pl
from jax.experimental.pallas import tpu as pltpu


# ---------------------------------------------------------------------------
# Compile-time integer helpers.
# ---------------------------------------------------------------------------
def _round_up(x, m):
    return ((x + m - 1) // m) * m


def _pick_tile_and_pad(dim, want, align):
    """Pick a tile (multiple of `align`, <= ~want) and the padded dim.

    Never falls back to the full (possibly huge) dimension; prefers a tile that
    divides the aligned dim exactly, otherwise pads up to a multiple of `want`.
    """
    dim_al = _round_up(dim, align)
    if dim_al <= want:
        return dim_al, dim_al
    lo = max(align, (want // 2 // align) * align)
    for t in range(want, lo - 1, -align):
        if dim_al % t == 0:
            return t, dim_al
    return want, _round_up(dim, want)


def _vmem_capacity_bytes():
    """Physical VMEM per TensorCore; conservative 64 MiB (v7x) fallback."""
    try:
        cap = int(getattr(pltpu.get_tpu_info(), "vmem_capacity_bytes"))
        if cap > 0:
            return cap
    except Exception:
        pass
    return 64 * 1024 * 1024


def _pad2d(x, rows, cols):
    r, c = x.shape
    if r == rows and c == cols:
        return x
    return jnp.pad(x, ((0, rows - r), (0, cols - c)))


# ---------------------------------------------------------------------------
# Kernels.
# ---------------------------------------------------------------------------
def _proj_kernel_resident(adj_ref, w_ref, out_ref):
    # Whole (padded) weight sits resident in VMEM; one MXU matmul per row tile.
    out_ref[...] = jnp.dot(
        adj_ref[...], w_ref[...], preferred_element_type=jnp.float32
    ).astype(out_ref.dtype)


def _proj_kernel_tiled(adj_ref, w_ref, out_ref):
    # The f32 output block stays resident across the k axis (same block index),
    # so accumulate directly into it -- no separate VMEM accumulator needed.
    @pl.when(pl.program_id(2) == 0)
    def _():
        out_ref[...] = jnp.zeros_like(out_ref)

    out_ref[...] += jnp.dot(
        adj_ref[...], w_ref[...], preferred_element_type=jnp.float32
    )


# ---------------------------------------------------------------------------
# Wrapper.
# ---------------------------------------------------------------------------
def random_projection(adj, weight, *, use_bf16=False):
    """Computes adj @ weight (PyTorch RandomProjection.forward) on TPU.

    adj:    (N, K) float32
    weight: (K, H) float32
    returns (N, H) float32
    """
    N, K = adj.shape
    K2, H = weight.shape
    assert K == K2, "inner dims must match"
    out_dtype = jnp.float32

    if use_bf16:
        # TODO(synk): bf16 inputs change numerics (~1e-2 rel) vs torch float32.
        adj = adj.astype(jnp.bfloat16)
        weight = weight.astype(jnp.bfloat16)
    in_itemsize = jnp.dtype(adj.dtype).itemsize

    cap = _vmem_capacity_bytes()
    budget = int(cap * 0.6)  # leave headroom for Mosaic internals / pipelining

    # Canonical padded dims: sublane axis -> x8, lane axis -> x128.
    n_pad8 = _round_up(N, 8)
    k_pad = _round_up(K, 128)   # lane axis of adj, sublane axis of weight
    h_pad = _round_up(H, 128)   # lane axis of weight/output (lane-dense vst)

    cost = pl.CostEstimate(
        flops=2 * N * K * H,
        transcendentals=0,
        bytes_accessed=4 * (N * K + K * H + N * H),
    )

    # ------------------- Path A: weight resident in VMEM -------------------
    w_bytes = k_pad * h_pad * in_itemsize
    per_row = 2 * k_pad * in_itemsize + 2 * h_pad * 4  # dbl-buf adj + out rows
    row_budget = budget - 2 * w_bytes
    if w_bytes <= 8 * 1024 * 1024 and row_budget >= 8 * per_row:
        tm_cap = max(8, (row_budget // per_row) // 8 * 8)
        tm = min(512, tm_cap, n_pad8)
        n_tiles = pl.cdiv(n_pad8, tm)
        if n_tiles == 1 and n_pad8 >= 256:
            n_tiles = 2  # keep both TensorCores (v7x) / megacore halves busy
        tm = _round_up(pl.cdiv(n_pad8, n_tiles), 8)
        n_tiles = pl.cdiv(n_pad8, tm)
        n_padded = tm * n_tiles

        adj_p = _pad2d(adj, n_padded, k_pad)
        w_p = _pad2d(weight, k_pad, h_pad)

        est = 2 * (tm * k_pad * in_itemsize + tm * h_pad * 4) + 2 * w_bytes
        vmem_limit = min(int(cap * 0.75), max(4 * est, 32 * 1024 * 1024))

        out_p = pl.pallas_call(
            _proj_kernel_resident,
            out_shape=jax.ShapeDtypeStruct((n_padded, h_pad), out_dtype),
            grid_spec=pltpu.PrefetchScalarGridSpec(
                num_scalar_prefetch=0,
                grid=(n_tiles,),
                in_specs=[
                    pl.BlockSpec((tm, k_pad), lambda i: (i, 0)),
                    pl.BlockSpec((k_pad, h_pad), lambda i: (0, 0)),
                ],
                out_specs=pl.BlockSpec((tm, h_pad), lambda i: (i, 0)),
            ),
            compiler_params=pltpu.CompilerParams(
                dimension_semantics=("parallel",),
                vmem_limit_bytes=vmem_limit,
            ),
            cost_estimate=cost,
        )(adj_p, w_p)
        return out_p[:N, :H]

    # ------------------- Path B: general (m, n, k) tiled matmul ------------
    want_tm, want_tn, want_tk = 512, 512, 1024

    def _estimate(tm, tn, tk):
        return 2 * (tm * tk + tk * tn) * in_itemsize + 2 * tm * tn * 4

    while _estimate(want_tm, want_tn, want_tk) > budget and want_tk > 256:
        want_tk //= 2
    while _estimate(want_tm, want_tn, want_tk) > budget and want_tn > 256:
        want_tn //= 2
    while _estimate(want_tm, want_tn, want_tk) > budget and want_tm > 128:
        want_tm //= 2

    tm, n_padded = _pick_tile_and_pad(N, want_tm, 8)
    tn, h_padded = _pick_tile_and_pad(H, want_tn, 128)
    tk, k_padded = _pick_tile_and_pad(K, want_tk, 128)

    adj_p = _pad2d(adj, n_padded, k_padded)
    w_p = _pad2d(weight, k_padded, h_padded)

    est = _estimate(tm, tn, tk)
    vmem_limit = min(int(cap * 0.75), max(4 * est, 32 * 1024 * 1024))

    grid = (n_padded // tm, h_padded // tn, k_padded // tk)

    out_p = pl.pallas_call(
        _proj_kernel_tiled,
        out_shape=jax.ShapeDtypeStruct((n_padded, h_padded), out_dtype),
        grid_spec=pltpu.PrefetchScalarGridSpec(
            num_scalar_prefetch=0,
            grid=grid,
            in_specs=[
                pl.BlockSpec((tm, tk), lambda i, j, k: (i, k)),
                pl.BlockSpec((tk, tn), lambda i, j, k: (k, j)),
            ],
            out_specs=pl.BlockSpec((tm, tn), lambda i, j, k: (i, j)),
        ),
        compiler_params=pltpu.CompilerParams(
            dimension_semantics=("parallel", "parallel", "arbitrary"),
            vmem_limit_bytes=vmem_limit,
        ),
        cost_estimate=cost,
    )(adj_p, w_p)
    return out_p[:N, :H]


def make_random_projection_params(input_dim, hidden, key):
    """Deterministic stand-in for torch.rand((input, hidden))."""
    return jax.random.uniform(
        key, (input_dim, hidden), dtype=jnp.float32, minval=0.0, maxval=1.0
    )


if __name__ == "__main__":
    # Small shapes: N=8 nodes, input (adj feature dim) = 32, hidden = 16.
    N, INPUT, HIDDEN = 8, 32, 16

    key = jax.random.PRNGKey(0)
    k_adj, k_w = jax.random.split(key)

    adj = jax.random.uniform(k_adj, (N, INPUT), dtype=jnp.float32)
    weight = make_random_projection_params(INPUT, HIDDEN, k_w)

    out = random_projection(adj, weight)
    out = jax.block_until_ready(out)

    # Correctness check against plain JAX reference.
    ref = adj @ weight
    assert out.shape == (N, HIDDEN)
    assert jnp.allclose(out, ref, atol=1e-5, rtol=1e-5)

    print("KERNEL_OK")
</pallas_src>

<mosaic_0001>
module attributes {stable_mosaic.version = 11 : i64} {
  func.func @_proj_kernel_resident(%arg0: i32, %arg1: memref<8x128xf32, #tpu.memory_space<vmem>>, %arg2: memref<128x128xf32, #tpu.memory_space<vmem>>, %arg3: memref<8x128xf32, #tpu.memory_space<vmem>>) attributes {dimension_semantics = [#tpu.dimension_semantics<parallel>], iteration_bounds = array<i64: 1>, scalar_prefetch = 0 : i64, scratch_operands = 0 : i64, tpu.core_type = #tpu.core_type<tc>, window_params = [{transform_indices = @transform_0, window_bounds = array<i64: 8, 128>}, {pipeline_mode = #tpu.pipeline_mode<synchronous>, transform_indices = @transform_1, window_bounds = array<i64: 128, 128>}, {transform_indices = @transform_2, window_bounds = array<i64: 8, 128>}]} {
    %c0 = arith.constant 0 : index
    %c0_0 = arith.constant 0 : index
    %0 = vector.load %arg1[%c0, %c0_0] : memref<8x128xf32, #tpu.memory_space<vmem>>, vector<8x128xf32>
    %c0_1 = arith.constant 0 : index
    %c0_2 = arith.constant 0 : index
    %1 = vector.load %arg2[%c0_1, %c0_2] : memref<128x128xf32, #tpu.memory_space<vmem>>, vector<128x128xf32>
    %cst = arith.constant dense<0.000000e+00> : vector<8x128xf32>
    %2 = tpu.matmul %0, %1, %cst {dimension_numbers = #tpu.dot_dimension_numbers<[1], [0], [0], [1], [0, 0, 1, 1], [], []>} : vector<8x128xf32>, vector<128x128xf32>, vector<8x128xf32> -> vector<8x128xf32>
    %c0_3 = arith.constant 0 : index
    %c0_4 = arith.constant 0 : index
    %3 = vector.load %arg3[%c0_3, %c0_4] : memref<8x128xf32, #tpu.memory_space<vmem>>, vector<8x128xf32>
    tpu.vector_store %arg3[%c0_3, %c0_4], %2 {strides = array<i32>} : memref<8x128xf32, #tpu.memory_space<vmem>>, vector<8x128xf32>,
    return
  }
  func.func @transform_0(%arg0: i32) -> (i32, i32) {
    %c0_i32 = arith.constant 0 : i32
    %c0_i32_0 = arith.constant 0 : i32
    return %arg0, %c0_i32 : i32, i32
  }
  func.func @transform_1(%arg0: i32) -> (i32, i32) {
    %c0_i32 = arith.constant 0 : i32
    %c0_i32_0 = arith.constant 0 : i32
    %c0_i32_1 = arith.constant 0 : i32
    return %c0_i32, %c0_i32_0 : i32, i32
  }
  func.func @transform_2(%arg0: i32) -> (i32, i32) {
    %c0_i32 = arith.constant 0 : i32
    %c0_i32_0 = arith.constant 0 : i32
    return %arg0, %c0_i32 : i32, i32
  }
}

</mosaic_0001>

<llo_original>
// kernel: tpu_custom_call.1
$region0: #{tpu_custom_call.1}
  #allocation0 [shape = 'u32[]', space=smem, size = 0x4, offset = 0x4, fixed_abs, tag = 'smem constant byte address 0x4 - core index']
  #allocation1 [shape = 'u32[72,128]{1,0:T(1,128)}', space=vmem, size = 0x9000, scoped, tag = 'internal scratch']
  %s0 = inlined_call_operand.hbm [shape: f32[8,128], index: 0, kind: input, shape index: {}]
  %s1 = inlined_call_operand.hbm [shape: f32[128,128], index: 1, kind: input, shape index: {}]
  %s2 = inlined_call_operand.hbm [shape: f32[8,128], index: 2, kind: output, shape index: {}]
  %s3 = sld [smem:[#allocation0]]
  $region26: #{tpu_custom_call.1} parent=0
    _
  %s5 = ssub.s32 1, %s3
  %s6 = scalar_select 0, %s5, %s3
  $region1: #{tpu_custom_call.1} parent=0
    #allocation2 [shape = 'u8[4096]{0}', space=vmem, size = 0x1000, scoped, tag = 'input window, operand 0, single buffered']
    #allocation3 [shape = 's32[1]{0}', space=sflag, size = 0x4, scoped, tag = 'scoped memory for tpu_custom_call.1']
    #allocation4 [shape = 's32[1]{0}', space=sflag, size = 0x4, scoped, tag = 'scoped memory for tpu_custom_call.1']
    #allocation5 [shape = 'u8[65536]{0}', space=vmem, size = 0x10000, scoped, tag = 'input window, operand 1, single buffered']
    #allocation6 [shape = 's32[1]{0}', space=sflag, size = 0x4, scoped, tag = 'scoped memory for tpu_custom_call.1']
    #allocation7 [shape = 'u8[4096]{0}', space=vmem, size = 0x1000, scoped, tag = 'output window, operand 0, single buffered']
    %7 = vsyncpa [#allocation3], 0
    %8 = vsyncpa [#allocation6], 0
    %9 = vsyncpa [#allocation4], 0
    // Predicated region
    $region2: #{tpu_custom_call.1} parent=1 // pred_check
      _
    $region3: #{tpu_custom_call.1} parent=1 // pred_check_branch
      %11 = sbr.rel (0) target = $region5
    $region4: #{tpu_custom_call.1} parent=1 // pred_region
      %13 = vsyncadd [#allocation3], 0
      %s15 = sshll.u32 %s0, 4
      %s16 = int_to_ptr.hbm [resolvable:$true] %s15
      %s17 = sshll.u32 [#allocation2], 4
      %s18 = int_to_ptr.vmem [resolvable:$true] %s17
      %20 = dma.hbm_to_vmem [thread:$0]  %s16, 128, %s18, [#allocation3]
    $region5: #{tpu_custom_call.1} parent=1 // pred_fallthru
      _
    // Predicated region
    $region6: #{tpu_custom_call.1} parent=1 // pred_check
      _
    $region7: #{tpu_custom_call.1} parent=1 // pred_check_branch
      %22 = sbr.rel (0) target = $region9
    $region8: #{tpu_custom_call.1} parent=1 // pred_region
      %24 = vsyncadd [#allocation6], 0
      %s25 = sshll.u32 %s1, 4
      %s26 = int_to_ptr.hbm [resolvable:$true] %s25
      %s27 = sshll.u32 [#allocation5], 4
      %s28 = int_to_ptr.vmem [resolvable:$true] %s27
      %33 = dma.hbm_to_vmem [thread:$0]  %s26, 2048, %s28, [#allocation6], 128, 128, 8
    $region9: #{tpu_custom_call.1} parent=1 // pred_fallthru
      _
    // Predicated region
    $region10: #{tpu_custom_call.1} parent=1 // pred_check
      _
    $region11: #{tpu_custom_call.1} parent=1 // pred_check_branch
      %35 = sbr.rel (0) target = $region13
    $region12: #{tpu_custom_call.1} parent=1 // pred_region
      %37 = dma.done [#allocation3], 128
    $region13: #{tpu_custom_call.1} parent=1 // pred_fallthru
      _
    // Predicated region
    $region14: #{tpu_custom_call.1} parent=1 // pred_check
      _
    $region15: #{tpu_custom_call.1} parent=1 // pred_check_branch
      %39 = sbr.rel (0) target = $region17
    $region16: #{tpu_custom_call.1} parent=1 // pred_region
      %41 = dma.done [#allocation6], 2048
    $region17: #{tpu_custom_call.1} parent=1 // pred_fallthru
      _
    %v42 = vld [vmem:[#allocation2] sm:$0xff]
    %v43 = vld [vmem:[#allocation5] sm:$0xff]
    %v44 = vld [vmem:[#allocation5 + $0x8] sm:$0xff]
    %v45 = vld [vmem:[#allocation5 + $0x10] sm:$0xff]
    %v46 = vld [vmem:[#allocation5 + $0x18] sm:$0xff]
    %v47 = vld [vmem:[#allocation5 + $0x20] sm:$0xff]
    %v48 = vld [vmem:[#allocation5 + $0x28] sm:$0xff]
    %v49 = vld [vmem:[#allocation5 + $0x30] sm:$0xff]
    %v50 = vld [vmem:[#allocation5 + $0x38] sm:$0xff]
    %v51 = vld [vmem:[#allocation5 + $0x40] sm:$0xff]
    %v52 = vld [vmem:[#allocation5 + $0x48] sm:$0xff]
    %v53 = vld [vmem:[#allocation5 + $0x50] sm:$0xff]
    %v54 = vld [vmem:[#allocation5 + $0x58] sm:$0xff]
    %v55 = vld [vmem:[#allocation5 + $0x60] sm:$0xff]
    %v56 = vld [vmem:[#allocation5 + $0x68] sm:$0xff]
    %v57 = vld [vmem:[#allocation5 + $0x70] sm:$0xff]
    %v58 = vld [vmem:[#allocation5 + $0x78] sm:$0xff]
    %59 = vmatpush.msra.mxu0 %v58
    %60 = vmatpush.msra.mxu0 %v57
    %61 = vmatpush.msra.mxu0 %v56
    %62 = vmatpush.msra.mxu0 %v55
    %63 = vmatpush.msra.mxu0 %v54
    %64 = vmatpush.msra.mxu0 %v53
    %65 = vmatpush.msra.mxu0 %v52
    %66 = vmatpush.msra.mxu0 %v51
    %67 = vmatpush.msra.mxu0 %v50
    %68 = vmatpush.msra.mxu0 %v49
    %69 = vmatpush.msra.mxu0 %v48
    %70 = vmatpush.msra.mxu0 %v47
    %71 = vmatpush.msra.mxu0 %v46
    %72 = vmatpush.msra.mxu0 %v45
    %73 = vmatpush.msra.mxu0 %v44
    %74 = vmatpush.msra.mxu0 %v43
    %75 = vmatmul.f32.gmra.mxu0 %v42
    %v76 = vpop.f32.mrf.mxu0
    %v77 = vadd.f32 0.0, %v76
    %78 = vdwg.mxu0
    %79 = vst [vmem:[#allocation7] sm:$0xff] %v77
    // Predicated region
    $region18: #{tpu_custom_call.1} parent=1 // pred_check
      _
    $region19: #{tpu_custom_call.1} parent=1 // pred_check_branch
      %81 = sbr.rel (0) target = $region21
    $region20: #{tpu_custom_call.1} parent=1 // pred_region
      %83 = vsyncadd [#allocation4], 0
      %s85 = sshll.u32 [#allocation7], 4
      %s86 = int_to_ptr.vmem [resolvable:$true] %s85
      %s87 = sshll.u32 %s2, 4
      %s88 = int_to_ptr.hbm [resolvable:$true] %s87
      %90 = dma.vmem_to_hbm [thread:$0]  %s86, 128, %s88, [#allocation4]
    $region21: #{tpu_custom_call.1} parent=1 // pred_fallthru
      _
    // Predicated region
    $region22: #{tpu_custom_call.1} parent=1 // pred_check
      _
    $region23: #{tpu_custom_call.1} parent=1 // pred_check_branch
      %92 = sbr.rel (0) target = $region25
    $region24: #{tpu_custom_call.1} parent=1 // pred_region
      %94 = dma.done [#allocation4], 128
    $region25: #{tpu_custom_call.1} parent=1 // pred_fallthru
      _
    %95 = vsyncpa [#allocation3], 1
    %96 = vsyncpa [#allocation6], 1
    %97 = vsyncpa [#allocation4], 1

</llo_original>
